<compile_context>
chip_gen: v5e
topology: v5e:2x2
jax: 0.10.0
libtpu: 0.0.40
codegen_flags: <defaults>
</compile_context>

<pallas_src>
import jax
import jax.numpy as jnp
from jax import lax
from jax.experimental import pallas as pl
from jax.experimental.pallas import tpu as pltpu

_LANES = 128
_SUBLANES = 8


def _round_up(n, m):
    return ((n + m - 1) // m) * m


def _make_kernel(rows_valid, tm, chunk, needs_mask):
    """Reduction kernel for a (rows, 128) slab tiled as (tm, 128) blocks."""
    nfull, rem = divmod(tm, chunk)

    def kernel(x_ref, t_ref, out_ref):
        j = pl.program_id(0)

        @pl.when(j == 0)
        def _init():
            out_ref[...] = jnp.zeros_like(out_ref)

        def process(start, size):
            # `start` may be traced (chunk-loop index * chunk); `size` static.
            x = x_ref[pl.ds(start, size), :].astype(jnp.float32)
            t = t_ref[pl.ds(start, size), :].astype(jnp.float32)
            if needs_mask:
                # Mask rows past the true row count (partial last tile only).
                # sigmoid(-1e9)==0 and bce(-1e9, 0)==0 exactly, so masked rows
                # contribute nothing to any of the four sums.
                row = (j * tm + start
                       + lax.broadcasted_iota(jnp.int32, (size, _LANES), 0))
                valid = row < rows_valid
                x = jnp.where(valid, x, -1e9)
                t = jnp.where(valid, t, 0.0)

            # One shared transcendental e = exp(-|x|):
            #   sigmoid(x) = where(x>=0, 1, e) * 1/(1+e)
            #   bce(x, t)  = max(x, 0) - x*t + log(1+e)     (pos_weight == 1)
            e = jnp.exp(-jnp.abs(x))
            denom = 1.0 + e
            inv = pl.reciprocal(denom)            # exact; reuses denom
            p = jnp.where(x >= 0.0, 1.0, e) * inv
            bce = jnp.maximum(x, 0.0) - x * t + jnp.log(denom)

            # Keep per-chunk work purely elementwise: fold (size,128) down to a
            # vreg-shaped (8,128) partial (leading-axis sum = VALU adds, no
            # XLU).  The single cross-lane reduce happens once, in the wrapper.
            def fold(v):
                return jnp.sum(v.reshape(-1, _SUBLANES, _LANES), axis=0)

            out_ref[0] += fold(p * t)
            out_ref[1] += fold(p)
            out_ref[2] += fold(t)
            out_ref[3] += fold(bce)

        if nfull > 0:
            @pl.loop(0, nfull)
            def _chunks(c):
                process(pl.multiple_of(c * chunk, chunk), chunk)
        if rem:
            process(nfull * chunk, rem)

    return kernel


def ce_dice_loss(prediction, targets, *, d_weight=0.5, smooth=1e-8,
                 tm_max=4096, chunk=512):
    """prediction: logits (any shape); targets: 0/1 masks of the same shape."""
    assert chunk % _SUBLANES == 0
    tm_max = max(_SUBLANES, (tm_max // _SUBLANES) * _SUBLANES)

    total = int(prediction.size)

    # Keep the logits stream in its native dtype; targets are 0/1 masks, so a
    # bf16 cast is exact and halves their HBM stream.
    # TODO(synk): gate the bf16 cast if soft (non-binary) labels are possible.
    x = prediction.reshape(-1)
    t = targets.astype(jnp.bfloat16).reshape(-1)

    # Pad only up to an (8,128)-aligned flat length (<= 1023 elements).  No
    # tile-multiple row padding: ragged tiles are masked inside the kernel, so
    # when numel % 1024 == 0 nothing is ever copied.
    padded = _round_up(total, _SUBLANES * _LANES)
    if padded != total:
        x = jnp.pad(x, (0, padded - total), constant_values=-1e9)
        t = jnp.pad(t, (0, padded - total), constant_values=0)

    rows = padded // _LANES                       # multiple of 8
    x2 = x.reshape(rows, _LANES)
    t2 = t.reshape(rows, _LANES)

    # DMA tile: as large as possible (HBM efficiency); compute is chunked
    # inside the kernel so the live intermediates stay ~chunk-sized.
    tm = rows if rows <= tm_max else tm_max
    steps = -(-rows // tm)
    needs_mask = (rows % tm) != 0

    kernel = _make_kernel(rows, tm, chunk, needs_mask)

    cost = pl.CostEstimate(
        flops=int(20 * padded),
        transcendentals=int(2 * padded),
        bytes_accessed=int(x2.size * x2.dtype.itemsize
                           + t2.size * t2.dtype.itemsize
                           + 4 * 4 * _SUBLANES * _LANES),
    )

    partials = pl.pallas_call(
        kernel,
        out_shape=jax.ShapeDtypeStruct((4, _SUBLANES, _LANES), jnp.float32),
        grid=(steps,),
        in_specs=[
            pl.BlockSpec((tm, _LANES), lambda j: (j, 0)),
            pl.BlockSpec((tm, _LANES), lambda j: (j, 0)),
        ],
        # Constant output index across the sequential axis -> the (4,8,128)
        # block stays VMEM-resident as the accumulator and is written back once.
        out_specs=pl.BlockSpec((4, _SUBLANES, _LANES), lambda j: (0, 0, 0)),
        compiler_params=pltpu.CompilerParams(
            # TODO(synk): on v7x (2 TensorCores) split the row range across
            # cores via CORE_PARALLEL / pl.core_map; plain "parallel" was
            # measured as a codegen no-op, so a single sequential axis is used.
            dimension_semantics=("arbitrary",),
        ),
        cost_estimate=cost,
    )(x2, t2)

    # Final cross-lane reduce + dice/BCE combine: 4 scalars, negligible cost.
    sums = jnp.sum(partials, axis=(1, 2))  # [sum(p*t), sum(p), sum(t), sum(bce)]
    intersection = 2.0 * sums[0] + smooth
    union = sums[1] + sums[2] + smooth
    dice_loss = 1.0 - intersection / union
    bce_mean = sums[3] / float(total)
    return d_weight * dice_loss + (1.0 - d_weight) * bce_mean


def _reference(prediction, targets, d_weight=0.5, smooth=1e-8):
    x = prediction.astype(jnp.float32)
    t = targets.astype(jnp.float32)
    p = jax.nn.sigmoid(x)
    inter = 2.0 * jnp.sum(p * t) + smooth
    union = jnp.sum(p) + jnp.sum(t) + smooth
    dice = 1.0 - inter / union
    bce = jnp.mean(jnp.maximum(x, 0.0) - x * t + jnp.log1p(jnp.exp(-jnp.abs(x))))
    return d_weight * dice + (1.0 - d_weight) * bce


if __name__ == "__main__":
    key = jax.random.PRNGKey(0)
    k1, k2, k3, k4, k5, k6 = jax.random.split(key, 6)

    # Case 1: f32 NCHW logits (typical module input); numel is a multiple of
    # 1024 -> fully zero-copy path, single tile.
    pred1 = jax.random.normal(k1, (2, 4, 16, 16), dtype=jnp.float32)
    tgt1 = (jax.random.uniform(k2, (2, 4, 16, 16)) > 0.5).astype(jnp.float32)
    out1 = jax.block_until_ready(ce_dice_loss(pred1, tgt1))
    ref1 = _reference(pred1, tgt1)
    assert jnp.allclose(out1, ref1, atol=1e-5, rtol=1e-5), (out1, ref1)

    # Case 2: bf16 logits with a ragged numel -> exercises the small flat-pad
    # path and native-bf16 HBM reads.
    pred2 = jax.random.normal(k3, (2, 3, 15, 17), dtype=jnp.bfloat16)
    tgt2 = (jax.random.uniform(k4, (2, 3, 15, 17)) > 0.5).astype(jnp.float32)
    out2 = jax.block_until_ready(ce_dice_loss(pred2, tgt2))
    ref2 = _reference(pred2, tgt2)
    assert jnp.allclose(out2, ref2, atol=1e-4, rtol=1e-4), (out2, ref2)

    # Cases 3/4: small tile overrides force the multi-step grid, the in-kernel
    # ragged-tile masking and the inner chunk loop (covers every code path).
    pred3 = jax.random.normal(k5, (2, 4, 32, 20), dtype=jnp.float32)
    tgt3 = (jax.random.uniform(k6, (2, 4, 32, 20)) > 0.5).astype(jnp.float32)
    ref3 = _reference(pred3, tgt3)
    out3 = jax.block_until_ready(ce_dice_loss(pred3, tgt3, tm_max=16, chunk=8))
    assert jnp.allclose(out3, ref3, atol=1e-5, rtol=1e-5), (out3, ref3)
    out4 = jax.block_until_ready(ce_dice_loss(pred3, tgt3, tm_max=24, chunk=16))
    assert jnp.allclose(out4, ref3, atol=1e-5, rtol=1e-5), (out4, ref3)

    print("KERNEL_OK")
</pallas_src>

<mosaic_0001>
module attributes {stable_mosaic.version = 11 : i64} {
  func.func @kernel(%arg0: i32, %arg1: memref<16x128xf32, #tpu.memory_space<vmem>>, %arg2: memref<16x128xbf16, #tpu.memory_space<vmem>>, %arg3: memref<4x8x128xf32, #tpu.memory_space<vmem>>) attributes {dimension_semantics = [#tpu.dimension_semantics<arbitrary>], iteration_bounds = array<i64: 1>, scalar_prefetch = 0 : i64, scratch_operands = 0 : i64, tpu.core_type = #tpu.core_type<tc>, window_params = [{transform_indices = @transform_0, window_bounds = array<i64: 16, 128>}, {transform_indices = @transform_1, window_bounds = array<i64: 16, 128>}, {pipeline_mode = #tpu.pipeline_mode<synchronous>, transform_indices = @transform_2, window_bounds = array<i64: 4, 8, 128>}]} {
    %c0_i32 = arith.constant 0 : i32
    %0 = arith.cmpi eq, %arg0, %c0_i32 : i32
    %1 = arith.extui %0 : i1 to i32
    %c0_i32_0 = arith.constant 0 : i32
    %2 = arith.cmpi ne, %1, %c0_i32_0 : i32
    scf.if %2 {
      %cst_33 = arith.constant 0.000000e+00 : f32
      %57 = vector.broadcast %cst_33 : f32 to vector<4x8x128xf32>
      %c0_34 = arith.constant 0 : index
      %c0_35 = arith.constant 0 : index
      %c0_36 = arith.constant 0 : index
      %58 = vector.load %arg3[%c0_34, %c0_35, %c0_36] : memref<4x8x128xf32, #tpu.memory_space<vmem>>, vector<4x8x128xf32>
      tpu.vector_store %arg3[%c0_34, %c0_35, %c0_36], %57 {strides = array<i32>} : memref<4x8x128xf32, #tpu.memory_space<vmem>>, vector<4x8x128xf32>,
    } else {
    }
    %c0 = arith.constant 0 : index
    %c0_1 = arith.constant 0 : index
    %3 = vector.load %arg1[%c0, %c0_1] : memref<16x128xf32, #tpu.memory_space<vmem>>, vector<16x128xf32>
    %c0_2 = arith.constant 0 : index
    %c0_3 = arith.constant 0 : index
    %4 = vector.load %arg2[%c0_2, %c0_3] : memref<16x128xbf16, #tpu.memory_space<vmem>>, vector<16x128xbf16>
    %5 = arith.extf %4 : vector<16x128xbf16> to vector<16x128xf32>
    %6 = math.absf %3 : vector<16x128xf32>
    %cst = arith.constant 0.000000e+00 : f32
    %7 = vector.broadcast %cst : f32 to vector<16x128xf32>
    %8 = arith.subf %7, %6 : vector<16x128xf32>
    %9 = math.exp %8 : vector<16x128xf32>
    %cst_4 = arith.constant 1.000000e+00 : f32
    %10 = vector.broadcast %cst_4 : f32 to vector<16x128xf32>
    %11 = arith.addf %10, %9 : vector<16x128xf32>
    %12 = tpu.reciprocal %11 : vector<16x128xf32> -> vector<16x128xf32>
    %cst_5 = arith.constant 0.000000e+00 : f32
    %13 = vector.broadcast %cst_5 : f32 to vector<16x128xf32>
    %14 = arith.cmpf oge, %3, %13 : vector<16x128xf32>
    %cst_6 = arith.constant 1.000000e+00 : f32
    %15 = vector.broadcast %cst_6 : f32 to vector<16x128xf32>
    %16 = arith.select %14, %15, %9 : vector<16x128xi1>, vector<16x128xf32>
    %17 = arith.mulf %16, %12 : vector<16x128xf32>
    %cst_7 = arith.constant 0.000000e+00 : f32
    %18 = vector.broadcast %cst_7 : f32 to vector<16x128xf32>
    %19 = arith.maximumf %3, %18 : vector<16x128xf32>
    %20 = arith.mulf %3, %5 : vector<16x128xf32>
    %21 = arith.subf %19, %20 : vector<16x128xf32>
    %22 = math.log %11 : vector<16x128xf32>
    %23 = arith.addf %21, %22 : vector<16x128xf32>
    %c0_8 = arith.constant 0 : index
    %c0_9 = arith.constant 0 : index
    %c0_10 = arith.constant 0 : index
    %24 = vector.load %arg3[%c0_8, %c0_9, %c0_10] : memref<4x8x128xf32, #tpu.memory_space<vmem>>, vector<1x8x128xf32>
    %25 = vector.shape_cast %24 : vector<1x8x128xf32> to vector<8x128xf32>
    %26 = arith.mulf %17, %5 : vector<16x128xf32>
    %27 = vector.shape_cast %26 : vector<16x128xf32> to vector<2x8x128xf32>
    %cst_11 = arith.constant dense<0.000000e+00> : vector<8x128xf32>
    %28 = vector.multi_reduction <add>, %27, %cst_11 [0] : vector<2x8x128xf32> to vector<8x128xf32>
    %29 = arith.addf %25, %28 : vector<8x128xf32>
    %c0_12 = arith.constant 0 : index
    %c0_13 = arith.constant 0 : index
    %c0_14 = arith.constant 0 : index
    %30 = vector.load %arg3[%c0_12, %c0_13, %c0_14] : memref<4x8x128xf32, #tpu.memory_space<vmem>>, vector<1x8x128xf32>
    %31 = vector.shape_cast %30 : vector<1x8x128xf32> to vector<8x128xf32>
    %32 = vector.shape_cast %29 : vector<8x128xf32> to vector<1x8x128xf32>
    tpu.vector_store %arg3[%c0_12, %c0_13, %c0_14], %32 {strides = array<i32>} : memref<4x8x128xf32, #tpu.memory_space<vmem>>, vector<1x8x128xf32>,
    %c1 = arith.constant 1 : index
    %c0_15 = arith.constant 0 : index
    %c0_16 = arith.constant 0 : index
    %33 = vector.load %arg3[%c1, %c0_15, %c0_16] : memref<4x8x128xf32, #tpu.memory_space<vmem>>, vector<1x8x128xf32>
    %34 = vector.shape_cast %33 : vector<1x8x128xf32> to vector<8x128xf32>
    %35 = vector.shape_cast %17 : vector<16x128xf32> to vector<2x8x128xf32>
    %cst_17 = arith.constant dense<0.000000e+00> : vector<8x128xf32>
    %36 = vector.multi_reduction <add>, %35, %cst_17 [0] : vector<2x8x128xf32> to vector<8x128xf32>
    %37 = arith.addf %34, %36 : vector<8x128xf32>
    %c1_18 = arith.constant 1 : index
    %c0_19 = arith.constant 0 : index
    %c0_20 = arith.constant 0 : index
    %38 = vector.load %arg3[%c1_18, %c0_19, %c0_20] : memref<4x8x128xf32, #tpu.memory_space<vmem>>, vector<1x8x128xf32>
    %39 = vector.shape_cast %38 : vector<1x8x128xf32> to vector<8x128xf32>
    %40 = vector.shape_cast %37 : vector<8x128xf32> to vector<1x8x128xf32>
    tpu.vector_store %arg3[%c1_18, %c0_19, %c0_20], %40 {strides = array<i32>} : memref<4x8x128xf32, #tpu.memory_space<vmem>>, vector<1x8x128xf32>,
    %c2 = arith.constant 2 : index
    %c0_21 = arith.constant 0 : index
    %c0_22 = arith.constant 0 : index
    %41 = vector.load %arg3[%c2, %c0_21, %c0_22] : memref<4x8x128xf32, #tpu.memory_space<vmem>>, vector<1x8x128xf32>
    %42 = vector.shape_cast %41 : vector<1x8x128xf32> to vector<8x128xf32>
    %43 = vector.shape_cast %5 : vector<16x128xf32> to vector<2x8x128xf32>
    %cst_23 = arith.constant dense<0.000000e+00> : vector<8x128xf32>
    %44 = vector.multi_reduction <add>, %43, %cst_23 [0] : vector<2x8x128xf32> to vector<8x128xf32>
    %45 = arith.addf %42, %44 : vector<8x128xf32>
    %c2_24 = arith.constant 2 : index
    %c0_25 = arith.constant 0 : index
    %c0_26 = arith.constant 0 : index
    %46 = vector.load %arg3[%c2_24, %c0_25, %c0_26] : memref<4x8x128xf32, #tpu.memory_space<vmem>>, vector<1x8x128xf32>
    %47 = vector.shape_cast %46 : vector<1x8x128xf32> to vector<8x128xf32>
    %48 = vector.shape_cast %45 : vector<8x128xf32> to vector<1x8x128xf32>
    tpu.vector_store %arg3[%c2_24, %c0_25, %c0_26], %48 {strides = array<i32>} : memref<4x8x128xf32, #tpu.memory_space<vmem>>, vector<1x8x128xf32>,
    %c3 = arith.constant 3 : index
    %c0_27 = arith.constant 0 : index
    %c0_28 = arith.constant 0 : index
    %49 = vector.load %arg3[%c3, %c0_27, %c0_28] : memref<4x8x128xf32, #tpu.memory_space<vmem>>, vector<1x8x128xf32>
    %50 = vector.shape_cast %49 : vector<1x8x128xf32> to vector<8x128xf32>
    %51 = vector.shape_cast %23 : vector<16x128xf32> to vector<2x8x128xf32>
    %cst_29 = arith.constant dense<0.000000e+00> : vector<8x128xf32>
    %52 = vector.multi_reduction <add>, %51, %cst_29 [0] : vector<2x8x128xf32> to vector<8x128xf32>
    %53 = arith.addf %50, %52 : vector<8x128xf32>
    %c3_30 = arith.constant 3 : index
    %c0_31 = arith.constant 0 : index
    %c0_32 = arith.constant 0 : index
    %54 = vector.load %arg3[%c3_30, %c0_31, %c0_32] : memref<4x8x128xf32, #tpu.memory_space<vmem>>, vector<1x8x128xf32>
    %55 = vector.shape_cast %54 : vector<1x8x128xf32> to vector<8x128xf32>
    %56 = vector.shape_cast %53 : vector<8x128xf32> to vector<1x8x128xf32>
    tpu.vector_store %arg3[%c3_30, %c0_31, %c0_32], %56 {strides = array<i32>} : memref<4x8x128xf32, #tpu.memory_space<vmem>>, vector<1x8x128xf32>,
    return
  }
  func.func @transform_0(%arg0: i32) -> (i32, i32) {
    %c0_i32 = arith.constant 0 : i32
    %c0_i32_0 = arith.constant 0 : i32
    return %arg0, %c0_i32 : i32, i32
  }
  func.func @transform_1(%arg0: i32) -> (i32, i32) {
    %c0_i32 = arith.constant 0 : i32
    %c0_i32_0 = arith.constant 0 : i32
    return %arg0, %c0_i32 : i32, i32
  }
  func.func @transform_2(%arg0: i32) -> (i32, i32, i32) {
    %c0_i32 = arith.constant 0 : i32
    %c0_i32_0 = arith.constant 0 : i32
    %c0_i32_1 = arith.constant 0 : i32
    %c0_i32_2 = arith.constant 0 : i32
    return %c0_i32, %c0_i32_0, %c0_i32_1 : i32, i32, i32
  }
}

</mosaic_0001>

<llo_original>
// kernel: tpu_custom_call.1
$region0: #{tpu_custom_call.1}
  #allocation0 [shape = 'u32[]', space=smem, size = 0x4, offset = 0x4, fixed_abs, tag = 'smem constant byte address 0x4 - core index']
  #allocation1 [shape = 'u32[72,128]{1,0:T(1,128)}', space=vmem, size = 0x9000, scoped, tag = 'internal scratch']
  %s0 = inlined_call_operand.hbm [shape: f32[16,128], index: 0, kind: input, shape index: {}]
  %s1 = inlined_call_operand.hbm [shape: bf16[16,128], index: 1, kind: input, shape index: {}]
  %s2 = inlined_call_operand.hbm [shape: f32[4,8,128], index: 2, kind: output, shape index: {}]
  %s3 = sld [smem:[#allocation0]]
  $region30: #{tpu_custom_call.1} parent=0
    _
  %s5 = ssub.s32 1, %s3
  %s6 = scalar_select 0, %s5, %s3
  $region1: #{tpu_custom_call.1} parent=0
    #allocation2 [shape = 'u8[8192]{0}', space=vmem, size = 0x2000, scoped, tag = 'input window, operand 0, single buffered']
    #allocation3 [shape = 's32[1]{0}', space=sflag, size = 0x4, scoped, tag = 'scoped memory for tpu_custom_call.1']
    #allocation4 [shape = 's32[1]{0}', space=sflag, size = 0x4, scoped, tag = 'scoped memory for tpu_custom_call.1']
    #allocation5 [shape = 'u8[4096]{0}', space=vmem, size = 0x1000, scoped, tag = 'input window, operand 1, single buffered']
    #allocation6 [shape = 's32[1]{0}', space=sflag, size = 0x4, scoped, tag = 'scoped memory for tpu_custom_call.1']
    #allocation7 [shape = 'u8[16384]{0}', space=vmem, size = 0x4000, scoped, tag = 'output window, operand 0, single buffered']
    %7 = vsyncpa [#allocation3], 0
    %8 = vsyncpa [#allocation6], 0
    %9 = vsyncpa [#allocation4], 0
    // Predicated region
    $region2: #{tpu_custom_call.1} parent=1 // pred_check
      _
    $region3: #{tpu_custom_call.1} parent=1 // pred_check_branch
      %11 = sbr.rel (0) target = $region5
    $region4: #{tpu_custom_call.1} parent=1 // pred_region
      %13 = vsyncadd [#allocation3], 0
      %s14 = sshll.u32 %s0, 4
      %s15 = int_to_ptr.hbm [resolvable:$true] %s14
      %s16 = sshll.u32 [#allocation2], 4
      %s17 = int_to_ptr.vmem [resolvable:$true] %s16
      %22 = dma.hbm_to_vmem [thread:$0]  %s15, 256, %s17, [#allocation3], 128, 128, 8
    $region5: #{tpu_custom_call.1} parent=1 // pred_fallthru
      _
    // Predicated region
    $region6: #{tpu_custom_call.1} parent=1 // pred_check
      _
    $region7: #{tpu_custom_call.1} parent=1 // pred_check_branch
      %24 = sbr.rel (0) target = $region9
    $region8: #{tpu_custom_call.1} parent=1 // pred_region
      %26 = vsyncadd [#allocation6], 0
      %s27 = sshll.u32 %s1, 4
      %s28 = int_to_ptr.hbm [resolvable:$true] %s27
      %s29 = sshll.u32 [#allocation5], 4
      %s30 = int_to_ptr.vmem [resolvable:$true] %s29
      %35 = dma.hbm_to_vmem [thread:$0]  %s28, 128, %s30, [#allocation6], 64, 64, 4
    $region9: #{tpu_custom_call.1} parent=1 // pred_fallthru
      _
    // Predicated region
    $region10: #{tpu_custom_call.1} parent=1 // pred_check
      _
    $region11: #{tpu_custom_call.1} parent=1 // pred_check_branch
      %37 = sbr.rel (0) target = $region13
    $region12: #{tpu_custom_call.1} parent=1 // pred_region
      %39 = dma.done [#allocation3], 256
    $region13: #{tpu_custom_call.1} parent=1 // pred_fallthru
      _
    // Predicated region
    $region14: #{tpu_custom_call.1} parent=1 // pred_check
      _
    $region15: #{tpu_custom_call.1} parent=1 // pred_check_branch
      %41 = sbr.rel (0) target = $region17
    $region16: #{tpu_custom_call.1} parent=1 // pred_region
      %43 = dma.done [#allocation6], 128
    $region17: #{tpu_custom_call.1} parent=1 // pred_fallthru
      _
    %p44 = scmp.eq.s32.totalorder 0, 0
    // Predicated region
    $region18: #{tpu_custom_call.1} parent=1 // pred_check
      %p45 = pneg %p44
    $region19: #{tpu_custom_call.1} parent=1 // pred_check_branch
      %47 = sbr.rel (%p45) target = $region21
    $region20: #{tpu_custom_call.1} parent=1 // pred_region
      %48 = vst [vmem:[#allocation7] sm:$0xff] 0.0
      %49 = vst [vmem:[#allocation7 + $0x8] sm:$0xff] 0.0
      %50 = vst [vmem:[#allocation7 + $0x10] sm:$0xff] 0.0
      %51 = vst [vmem:[#allocation7 + $0x18] sm:$0xff] 0.0
    $region21: #{tpu_custom_call.1} parent=1 // pred_fallthru
      _
    %v52 = vld [vmem:[#allocation2] sm:$0xff]
    %v53 = vld [vmem:[#allocation2 + $0x8] sm:$0xff]
    %v54 = vld [vmem:[#allocation5] sm:$0xf]
    %v55 = vld [vmem:[#allocation5 + $0x4] sm:$0xf]
    %v56 = vunpack.c.l.bf16 %v54
    %v57 = vunpack.c.l.bf16 %v55
    %v58 = vand.u32 2147483647, %v52
    %v59 = vand.u32 2147483647, %v53
    %v60 = vsub.f32 0.0, %v58
    %v61 = vsub.f32 0.0, %v59
    %v62 = vmul.f32 %v60, 1.442695
    %v63 = vpow.pop %v62
    %v64 = vmul.f32 %v61, 1.442695
    %v65 = vpow.pop %v64
    %v66 = vadd.f32 %v63, 1.0
    %v67 = vadd.f32 %v65, 1.0
    %v68 = vrcp.pop %v66
    %v69 = vmul.f32 %v66, %v68
    %v70 = vsub.f32 1.0, %v69
    %v71 = vmul.f32 %v68, %v70
    %v72 = vadd.f32 %v68, %v71
    %vm73 = vweird.f32 %v66
    %vm74 = vweird.f32 %v68
    %vm75 = vmor %vm73, %vm74
    %v76 = vsel %vm75, %v68, %v72
    %v77 = vand.u32 2147483647, %v66
    %vm78 = vcmp.eq.f32.partialorder %v77, 8.507059e+37
    %v79 = vand.u32 %v66, 2147483648
    %v80 = vor.u32 1.1754944e-38, %v79
    %v81 = vsel %vm78, %v80, %v76
    %v82 = vrcp.pop %v67
    %v83 = vmul.f32 %v67, %v82
    %v84 = vsub.f32 1.0, %v83
    %v85 = vmul.f32 %v82, %v84
    %v86 = vadd.f32 %v82, %v85
    %vm87 = vweird.f32 %v67
    %vm88 = vweird.f32 %v82
    %vm89 = vmor %vm87, %vm88
    %v90 = vsel %vm89, %v82, %v86
    %v91 = vand.u32 2147483647, %v67
    %vm92 = vcmp.eq.f32.partialorder %v91, 8.507059e+37
    %v93 = vand.u32 %v67, 2147483648
    %v94 = vor.u32 1.1754944e-38, %v93
    %v95 = vsel %vm92, %v94, %v90
    %vm96 = vcmp.ge.f32.partialorder %v52, 0.0
    %vm97 = vcmp.ge.f32.partialorder %v53, 0.0
    %v98 = vsel %vm96, 1.0, %v63
    %v99 = vsel %vm97, 1.0, %v65
    %v100 = vmul.f32 %v98, %v81
    %v101 = vmul.f32 %v99, %v95
    %v102 = vmax.f32 %v52, 0.0
    %v103 = vmax.f32 %v53, 0.0
    %v104 = vmul.f32 %v52, %v56
    %v105 = vmul.f32 %v53, %v57
    %v106 = vsub.f32 %v102, %v104
    %v107 = vsub.f32 %v103, %v105
    %v108 = vlog2.pop %v66
    %v109 = vmul.f32 %v108, 0.6931472
    %v110 = vlog2.pop %v67
    %v111 = vmul.f32 %v110, 0.6931472
    %v112 = vadd.f32 %v106, %v109
    %v113 = vadd.f32 %v107, %v111
    %v114 = vld [vmem:[#allocation7] sm:$0xff]
    %v115 = vmul.f32 %v100, %v56
    %v116 = vmul.f32 %v101, %v57
    %v117 = vadd.f32 %v115, %v116
    %v118 = vadd.f32 %v114, %v117
    %119 = vst [vmem:[#allocation7] sm:$0xff] %v118
    %s120 = scalar_lea.vmem [#allocation7], 8
    %v121 = vld [vmem:[%s120] sm:$0xff]
    %v122 = vadd.f32 %v100, %v101
    %v123 = vadd.f32 %v121, %v122
    %124 = vst [vmem:[%s120] sm:$0xff] %v123
    %s125 = scalar_lea.vmem [#allocation7], 16
    %v126 = vld [vmem:[%s125] sm:$0xff]
    %v127 = vadd.f32 %v56, %v57
    %v128 = vadd.f32 %v126, %v127
    %129 = vst [vmem:[%s125] sm:$0xff] %v128
    %s130 = scalar_lea.vmem [#allocation7], 24
    %v131 = vld [vmem:[%s130] sm:$0xff]
    %v132 = vadd.f32 %v112, %v113
    %v133 = vadd.f32 %v131, %v132
    %134 = vst [vmem:[%s130] sm:$0xff] %v133
    // Predicated region
    $region22: #{tpu_custom_call.1} parent=1 // pred_check
      _
    $region23: #{tpu_custom_call.1} parent=1 // pred_check_branch
      %136 = sbr.rel (0) target = $region25
    $region24: #{tpu_custom_call.1} parent=1 // pred_region
      %138 = vsyncadd [#allocation4], 0
      %s139 = sshll.u32 [#allocation7], 4
      %s140 = int_to_ptr.vmem [resolvable:$true] %s139
      %s141 = sshll.u32 %s2, 4
      %s142 = int_to_ptr.hbm [resolvable:$true] %s141
      %147 = dma.vmem_to_hbm [thread:$0]  %s140, 512, %s142, [#allocation4], 128, 128, 8
    $region25: #{tpu_custom_call.1} parent=1 // pred_fallthru
      _
    // Predicated region
    $region26: #{tpu_custom_call.1} parent=1 // pred_check
      _
    $region27: #{tpu_custom_call.1} parent=1 // pred_check_branch
      %149 = sbr.rel (0) target = $region29
    $region28: #{tpu_custom_call.1} parent=1 // pred_region
      %151 = dma.done [#allocation4], 512
    $region29: #{tpu_custom_call.1} parent=1 // pred_fallthru
      _
    %152 = vsyncpa [#allocation3], 1
    %153 = vsyncpa [#allocation6], 1
    %154 = vsyncpa [#allocation4], 1

</llo_original>
